<compile_context>
chip_gen: v5e
topology: v5e:2x2
jax: 0.10.0
libtpu: 0.0.40
codegen_flags: <defaults>
</compile_context>

<pallas_src>
import functools

import jax
import jax.numpy as jnp
from jax.experimental import pallas as pl
from jax.experimental.pallas import tpu as pltpu


def _pick_gg_tile(gg: int, target: int = 1024) -> int:
    """Lane-axis tile for the flattened G*G spatial dim.

    Either the full axis (block == array dim: always legal) or a multiple of
    128; a non-dividing tile leaves a ragged tail block that Pallas masks.
    """
    return gg if gg <= target else target


def _yolo_decode_kernel(anch_ref, pred_ref, out_ref, *,
                        num_anchors, grid_size, gg_tile):
    """Decode one (batch, GG-tile) block, channel-major in and out.

    anch_ref: SMEM (A, 2)     scaled anchors (w, h)
    pred_ref: VMEM (A, D, T)  raw network outputs, spatial cells on lanes
    out_ref : VMEM (A, D, T)  decoded outputs, same lane-dense layout
    """
    G = grid_size

    # Global flattened cell index gg = i*G + j for every lane of this tile;
    # row 0 carries gx = j, row 1 carries gy = i (cheap VPU ops, no side input).
    lane = jax.lax.broadcasted_iota(jnp.int32, (2, gg_tile), 1)
    lane = (lane + pl.program_id(1) * gg_tile).astype(jnp.float32)
    row = jax.lax.broadcasted_iota(jnp.int32, (2, gg_tile), 0)
    # +0.5 guards against f32 round-down of gg*(1/G) at exact multiples of G.
    gy = jnp.floor((lane + 0.5) * (1.0 / G))
    gxy = jnp.where(row == 0, lane - gy * G, gy)             # (2, T): gx / gy

    for a in range(num_anchors):                             # A is tiny; static unroll
        p = pred_ref[a].astype(jnp.float32)                  # (D, T), in-register upcast
        aw = anch_ref[a, 0]                                  # scalar anchor width
        ah = anch_ref[a, 1]                                  # scalar anchor height

        # Static sublane slices; every store below is 128-lane dense and goes
        # straight to the output tile (no scratch, no transpose).
        out_ref[a, 0:2, :] = (jax.nn.sigmoid(p[0:2, :]) + gxy).astype(out_ref.dtype)
        out_ref[a, 2:3, :] = (jnp.exp(p[2:3, :]) * aw).astype(out_ref.dtype)
        out_ref[a, 3:4, :] = (jnp.exp(p[3:4, :]) * ah).astype(out_ref.dtype)
        out_ref[a, 4:, :] = jax.nn.sigmoid(p[4:, :]).astype(out_ref.dtype)


class YOLOLayerPallas:
    """JAX/Pallas re-implementation of the PyTorch YOLOLayer."""

    def __init__(self, anchors, num_classes, img_dim, anchor_idxs):
        self.anchors = anchors
        self.num_classes = num_classes
        self.img_dim = img_dim
        self.anchor_idxs = anchor_idxs
        self.num_anchors = len(anchors)
        self.bbox_attrs = 5 + num_classes
        stride = self._get_stride()
        self.nG = int(self.img_dim / stride)
        self.scaled_anchors = jnp.array(
            [(a_w / stride, a_h / stride) for a_w, a_h in anchors],
            dtype=jnp.float32)                               # (A, 2)

    def _get_stride(self):
        if self.anchor_idxs[0] == self.num_anchors * 2:
            return 32
        elif self.anchor_idxs[0] == self.num_anchors:
            return 16
        return 8

    def decode_channel_major(self, x):
        """(B, A*(5+C), G, G) -> decoded (B, A, 5+C, G*G), lane-dense kernel output."""
        B, _, G, _ = x.shape
        A, D = self.num_anchors, self.bbox_attrs
        GG = G * G

        pred = x.reshape(B, A, D, GG)            # free, contiguous; native dtype, no cast

        tile = _pick_gg_tile(GG)
        n_tiles = pl.cdiv(GG, tile)
        kernel = functools.partial(_yolo_decode_kernel, num_anchors=A,
                                   grid_size=G, gg_tile=tile)

        return pl.pallas_call(
            kernel,
            out_shape=jax.ShapeDtypeStruct((B, A, D, GG), x.dtype),
            grid=(B, n_tiles),
            in_specs=[
                pl.BlockSpec(memory_space=pltpu.SMEM),               # scaled anchors (A, 2)
                pl.BlockSpec((None, A, D, tile), lambda b, t: (b, 0, 0, t)),
            ],
            out_specs=pl.BlockSpec((None, A, D, tile), lambda b, t: (b, 0, 0, t)),
            compiler_params=pltpu.CompilerParams(
                dimension_semantics=("parallel", "parallel")),
        )(self.scaled_anchors, pred)

    @functools.partial(jax.jit, static_argnums=0)
    def __call__(self, x):
        # x: NCHW (B, A*(5+C), G, G)
        B, _, G, _ = x.shape
        A, D = self.num_anchors, self.bbox_attrs

        out_cm = self.decode_channel_major(x)                # (B, A, D, GG)

        # Torch-contract adaptation: attribute-last (B, A*GG, 5+C).  Single
        # dense XLA transpose of the (small) decoded tensor; column order
        # already matches cat([pred_boxes(4), pred_conf(1), pred_cls(C)], -1).
        return jnp.transpose(out_cm, (0, 1, 3, 2)).reshape(B, A * G * G, D)


def _reference_jax(layer, x):
    """Pure-JAX reference of the forward semantics (intended YOLO decode)."""
    B = x.shape[0]
    G = x.shape[2]
    A, D, C = layer.num_anchors, layer.bbox_attrs, layer.num_classes
    p = x.reshape(B, A, D, G, G).transpose(0, 1, 3, 4, 2)             # (B,A,G,G,D)
    sx = jax.nn.sigmoid(p[..., 0])
    sy = jax.nn.sigmoid(p[..., 1])
    w = p[..., 2]
    h = p[..., 3]
    conf = jax.nn.sigmoid(p[..., 4])
    cls = jax.nn.sigmoid(p[..., 5:])
    gx = jnp.arange(G, dtype=jnp.float32).reshape(1, 1, 1, G)         # varies over j
    gy = jnp.arange(G, dtype=jnp.float32).reshape(1, 1, G, 1)         # varies over i
    aw = layer.scaled_anchors[:, 0].reshape(1, A, 1, 1)
    ah = layer.scaled_anchors[:, 1].reshape(1, A, 1, 1)
    # TODO(synk): the original torch line `pred_boxes[..., 2:4] = exp(w) * scaled_anchors`
    # only broadcasts for degenerate shapes; we implement the intended YOLO decode:
    # exp(w)*anchor_w and exp(h)*anchor_h.
    boxes = jnp.stack([sx + gx, sy + gy, jnp.exp(w) * aw, jnp.exp(h) * ah], axis=-1)
    return jnp.concatenate([boxes.reshape(B, -1, 4),
                            conf.reshape(B, -1, 1),
                            cls.reshape(B, -1, C)], axis=-1)


if __name__ == "__main__":
    # Small deterministic config: 2 anchors, 3 classes, stride 8, img_dim 128 -> G = 16.
    anchors = [(10.0, 13.0), (16.0, 30.0)]
    num_classes = 3
    img_dim = 128
    anchor_idxs = [0]                      # -> stride 8, nG = 16

    layer = YOLOLayerPallas(anchors, num_classes, img_dim, anchor_idxs)

    B = 2
    A = layer.num_anchors
    D = layer.bbox_attrs                   # 8
    G = layer.nG                           # 16

    key = jax.random.PRNGKey(0)
    x = jax.random.normal(key, (B, A * D, G, G), dtype=jnp.float32)

    out = layer(x)
    out = jax.block_until_ready(out)

    ref = _reference_jax(layer, x)
    assert out.shape == (B, A * G * G, D), out.shape
    assert jnp.allclose(out, ref, atol=1e-5, rtol=1e-5), "mismatch vs reference"

    print("KERNEL_OK")
</pallas_src>

<mosaic_0001>
module attributes {stable_mosaic.version = 11 : i64} {
  func.func @_yolo_decode_kernel(%arg0: i32, %arg1: i32, %arg2: memref<2x2xf32, #tpu.memory_space<smem>>, %arg3: memref<1x2x8x256xf32, #tpu.memory_space<vmem>>, %arg4: memref<1x2x8x256xf32, #tpu.memory_space<vmem>>) attributes {dimension_semantics = [#tpu.dimension_semantics<parallel>, #tpu.dimension_semantics<parallel>], iteration_bounds = array<i64: 2, 1>, scalar_prefetch = 0 : i64, scratch_operands = 0 : i64, tpu.core_type = #tpu.core_type<tc>, window_params = [{transform_indices = @transform_0, window_bounds = array<i64: 2, 2>}, {transform_indices = @transform_1, window_bounds = array<i64: 1, 2, 8, 256>}, {transform_indices = @transform_2, window_bounds = array<i64: 1, 2, 8, 256>}]} {
    %0 = tpu.iota {dimensions = array<i32: 1>} : vector<2x256xi32>
    %c256_i32 = arith.constant 256 : i32
    %1 = arith.muli %arg1, %c256_i32 : i32
    %2 = vector.broadcast %1 : i32 to vector<2x256xi32>
    %3 = arith.addi %0, %2 : vector<2x256xi32>
    %4 = arith.sitofp %3 : vector<2x256xi32> to vector<2x256xf32>
    %5 = tpu.iota {dimensions = array<i32: 0>} : vector<2x256xi32>
    %cst = arith.constant 5.000000e-01 : f32
    %6 = vector.broadcast %cst : f32 to vector<2x256xf32>
    %7 = arith.addf %4, %6 : vector<2x256xf32>
    %cst_0 = arith.constant 6.250000e-02 : f32
    %8 = vector.broadcast %cst_0 : f32 to vector<2x256xf32>
    %9 = arith.mulf %7, %8 : vector<2x256xf32>
    %10 = math.floor %9 : vector<2x256xf32>
    %c0_i32 = arith.constant 0 : i32
    %11 = vector.broadcast %c0_i32 : i32 to vector<2x256xi32>
    %12 = arith.cmpi eq, %5, %11 : vector<2x256xi32>
    %cst_1 = arith.constant 1.600000e+01 : f32
    %13 = vector.broadcast %cst_1 : f32 to vector<2x256xf32>
    %14 = arith.mulf %10, %13 : vector<2x256xf32>
    %15 = arith.subf %4, %14 : vector<2x256xf32>
    %16 = arith.select %12, %15, %10 : vector<2x256xi1>, vector<2x256xf32>
    %c0 = arith.constant 0 : index
    %c0_2 = arith.constant 0 : index
    %c0_3 = arith.constant 0 : index
    %c0_4 = arith.constant 0 : index
    %17 = vector.load %arg3[%c0, %c0_2, %c0_3, %c0_4] : memref<1x2x8x256xf32, #tpu.memory_space<vmem>>, vector<1x1x8x256xf32>
    %18 = vector.shape_cast %17 : vector<1x1x8x256xf32> to vector<8x256xf32>
    %c0_5 = arith.constant 0 : index
    %c0_6 = arith.constant 0 : index
    %19 = memref.load %arg2[%c0_5, %c0_6] : memref<2x2xf32, #tpu.memory_space<smem>>
    %c0_7 = arith.constant 0 : index
    %c1 = arith.constant 1 : index
    %20 = memref.load %arg2[%c0_7, %c1] : memref<2x2xf32, #tpu.memory_space<smem>>
    %21 = vector.extract_strided_slice %18 {offsets = [0, 0], sizes = [2, 256], strides = [1, 1]} : vector<8x256xf32> to vector<2x256xf32>
    %22 = arith.negf %21 : vector<2x256xf32>
    %23 = math.exp %22 : vector<2x256xf32>
    %cst_8 = arith.constant 1.000000e+00 : f32
    %24 = vector.broadcast %cst_8 : f32 to vector<2x256xf32>
    %25 = arith.addf %24, %23 : vector<2x256xf32>
    %26 = arith.divf %24, %25 : vector<2x256xf32>
    %27 = arith.addf %26, %16 : vector<2x256xf32>
    %c0_9 = arith.constant 0 : index
    %c0_10 = arith.constant 0 : index
    %c0_11 = arith.constant 0 : index
    %c0_12 = arith.constant 0 : index
    %28 = vector.load %arg4[%c0_9, %c0_10, %c0_11, %c0_12] : memref<1x2x8x256xf32, #tpu.memory_space<vmem>>, vector<1x1x2x256xf32>
    %29 = vector.shape_cast %28 : vector<1x1x2x256xf32> to vector<2x256xf32>
    %30 = vector.shape_cast %27 : vector<2x256xf32> to vector<1x1x2x256xf32>
    tpu.vector_store %arg4[%c0_9, %c0_10, %c0_11, %c0_12], %30 {strides = array<i32>} : memref<1x2x8x256xf32, #tpu.memory_space<vmem>>, vector<1x1x2x256xf32>,
    %31 = vector.extract_strided_slice %18 {offsets = [2, 0], sizes = [1, 256], strides = [1, 1]} : vector<8x256xf32> to vector<1x256xf32>
    %32 = math.exp %31 : vector<1x256xf32>
    %33 = vector.broadcast %19 : f32 to vector<1x256xf32>
    %34 = arith.mulf %32, %33 : vector<1x256xf32>
    %c0_13 = arith.constant 0 : index
    %c0_14 = arith.constant 0 : index
    %c2 = arith.constant 2 : index
    %c0_15 = arith.constant 0 : index
    %35 = vector.load %arg4[%c0_13, %c0_14, %c2, %c0_15] : memref<1x2x8x256xf32, #tpu.memory_space<vmem>>, vector<1x1x1x256xf32>
    %36 = vector.shape_cast %35 : vector<1x1x1x256xf32> to vector<1x256xf32>
    %37 = vector.shape_cast %34 : vector<1x256xf32> to vector<1x1x1x256xf32>
    tpu.vector_store %arg4[%c0_13, %c0_14, %c2, %c0_15], %37 {strides = array<i32>} : memref<1x2x8x256xf32, #tpu.memory_space<vmem>>, vector<1x1x1x256xf32>,
    %38 = vector.extract_strided_slice %18 {offsets = [3, 0], sizes = [1, 256], strides = [1, 1]} : vector<8x256xf32> to vector<1x256xf32>
    %39 = math.exp %38 : vector<1x256xf32>
    %40 = vector.broadcast %20 : f32 to vector<1x256xf32>
    %41 = arith.mulf %39, %40 : vector<1x256xf32>
    %c0_16 = arith.constant 0 : index
    %c0_17 = arith.constant 0 : index
    %c3 = arith.constant 3 : index
    %c0_18 = arith.constant 0 : index
    %42 = vector.load %arg4[%c0_16, %c0_17, %c3, %c0_18] : memref<1x2x8x256xf32, #tpu.memory_space<vmem>>, vector<1x1x1x256xf32>
    %43 = vector.shape_cast %42 : vector<1x1x1x256xf32> to vector<1x256xf32>
    %44 = vector.shape_cast %41 : vector<1x256xf32> to vector<1x1x1x256xf32>
    tpu.vector_store %arg4[%c0_16, %c0_17, %c3, %c0_18], %44 {strides = array<i32>} : memref<1x2x8x256xf32, #tpu.memory_space<vmem>>, vector<1x1x1x256xf32>,
    %45 = vector.extract_strided_slice %18 {offsets = [4, 0], sizes = [4, 256], strides = [1, 1]} : vector<8x256xf32> to vector<4x256xf32>
    %46 = arith.negf %45 : vector<4x256xf32>
    %47 = math.exp %46 : vector<4x256xf32>
    %cst_19 = arith.constant 1.000000e+00 : f32
    %48 = vector.broadcast %cst_19 : f32 to vector<4x256xf32>
    %49 = arith.addf %48, %47 : vector<4x256xf32>
    %50 = arith.divf %48, %49 : vector<4x256xf32>
    %c0_20 = arith.constant 0 : index
    %c0_21 = arith.constant 0 : index
    %c4 = arith.constant 4 : index
    %c0_22 = arith.constant 0 : index
    %51 = vector.load %arg4[%c0_20, %c0_21, %c4, %c0_22] : memref<1x2x8x256xf32, #tpu.memory_space<vmem>>, vector<1x1x4x256xf32>
    %52 = vector.shape_cast %51 : vector<1x1x4x256xf32> to vector<4x256xf32>
    %53 = vector.shape_cast %50 : vector<4x256xf32> to vector<1x1x4x256xf32>
    tpu.vector_store %arg4[%c0_20, %c0_21, %c4, %c0_22], %53 {strides = array<i32>} : memref<1x2x8x256xf32, #tpu.memory_space<vmem>>, vector<1x1x4x256xf32>,
    %c0_23 = arith.constant 0 : index
    %c1_24 = arith.constant 1 : index
    %c0_25 = arith.constant 0 : index
    %c0_26 = arith.constant 0 : index
    %54 = vector.load %arg3[%c0_23, %c1_24, %c0_25, %c0_26] : memref<1x2x8x256xf32, #tpu.memory_space<vmem>>, vector<1x1x8x256xf32>
    %55 = vector.shape_cast %54 : vector<1x1x8x256xf32> to vector<8x256xf32>
    %c1_27 = arith.constant 1 : index
    %c0_28 = arith.constant 0 : index
    %56 = memref.load %arg2[%c1_27, %c0_28] : memref<2x2xf32, #tpu.memory_space<smem>>
    %c1_29 = arith.constant 1 : index
    %c1_30 = arith.constant 1 : index
    %57 = memref.load %arg2[%c1_29, %c1_30] : memref<2x2xf32, #tpu.memory_space<smem>>
    %58 = vector.extract_strided_slice %55 {offsets = [0, 0], sizes = [2, 256], strides = [1, 1]} : vector<8x256xf32> to vector<2x256xf32>
    %59 = arith.negf %58 : vector<2x256xf32>
    %60 = math.exp %59 : vector<2x256xf32>
    %cst_31 = arith.constant 1.000000e+00 : f32
    %61 = vector.broadcast %cst_31 : f32 to vector<2x256xf32>
    %62 = arith.addf %61, %60 : vector<2x256xf32>
    %63 = arith.divf %61, %62 : vector<2x256xf32>
    %64 = arith.addf %63, %16 : vector<2x256xf32>
    %c0_32 = arith.constant 0 : index
    %c1_33 = arith.constant 1 : index
    %c0_34 = arith.constant 0 : index
    %c0_35 = arith.constant 0 : index
    %65 = vector.load %arg4[%c0_32, %c1_33, %c0_34, %c0_35] : memref<1x2x8x256xf32, #tpu.memory_space<vmem>>, vector<1x1x2x256xf32>
    %66 = vector.shape_cast %65 : vector<1x1x2x256xf32> to vector<2x256xf32>
    %67 = vector.shape_cast %64 : vector<2x256xf32> to vector<1x1x2x256xf32>
    tpu.vector_store %arg4[%c0_32, %c1_33, %c0_34, %c0_35], %67 {strides = array<i32>} : memref<1x2x8x256xf32, #tpu.memory_space<vmem>>, vector<1x1x2x256xf32>,
    %68 = vector.extract_strided_slice %55 {offsets = [2, 0], sizes = [1, 256], strides = [1, 1]} : vector<8x256xf32> to vector<1x256xf32>
    %69 = math.exp %68 : vector<1x256xf32>
    %70 = vector.broadcast %56 : f32 to vector<1x256xf32>
    %71 = arith.mulf %69, %70 : vector<1x256xf32>
    %c0_36 = arith.constant 0 : index
    %c1_37 = arith.constant 1 : index
    %c2_38 = arith.constant 2 : index
    %c0_39 = arith.constant 0 : index
    %72 = vector.load %arg4[%c0_36, %c1_37, %c2_38, %c0_39] : memref<1x2x8x256xf32, #tpu.memory_space<vmem>>, vector<1x1x1x256xf32>
    %73 = vector.shape_cast %72 : vector<1x1x1x256xf32> to vector<1x256xf32>
    %74 = vector.shape_cast %71 : vector<1x256xf32> to vector<1x1x1x256xf32>
    tpu.vector_store %arg4[%c0_36, %c1_37, %c2_38, %c0_39], %74 {strides = array<i32>} : memref<1x2x8x256xf32, #tpu.memory_space<vmem>>, vector<1x1x1x256xf32>,
    %75 = vector.extract_strided_slice %55 {offsets = [3, 0], sizes = [1, 256], strides = [1, 1]} : vector<8x256xf32> to vector<1x256xf32>
    %76 = math.exp %75 : vector<1x256xf32>
    %77 = vector.broadcast %57 : f32 to vector<1x256xf32>
    %78 = arith.mulf %76, %77 : vector<1x256xf32>
    %c0_40 = arith.constant 0 : index
    %c1_41 = arith.constant 1 : index
    %c3_42 = arith.constant 3 : index
    %c0_43 = arith.constant 0 : index
    %79 = vector.load %arg4[%c0_40, %c1_41, %c3_42, %c0_43] : memref<1x2x8x256xf32, #tpu.memory_space<vmem>>, vector<1x1x1x256xf32>
    %80 = vector.shape_cast %79 : vector<1x1x1x256xf32> to vector<1x256xf32>
    %81 = vector.shape_cast %78 : vector<1x256xf32> to vector<1x1x1x256xf32>
    tpu.vector_store %arg4[%c0_40, %c1_41, %c3_42, %c0_43], %81 {strides = array<i32>} : memref<1x2x8x256xf32, #tpu.memory_space<vmem>>, vector<1x1x1x256xf32>,
    %82 = vector.extract_strided_slice %55 {offsets = [4, 0], sizes = [4, 256], strides = [1, 1]} : vector<8x256xf32> to vector<4x256xf32>
    %83 = arith.negf %82 : vector<4x256xf32>
    %84 = math.exp %83 : vector<4x256xf32>
    %cst_44 = arith.constant 1.000000e+00 : f32
    %85 = vector.broadcast %cst_44 : f32 to vector<4x256xf32>
    %86 = arith.addf %85, %84 : vector<4x256xf32>
    %87 = arith.divf %85, %86 : vector<4x256xf32>
    %c0_45 = arith.constant 0 : index
    %c1_46 = arith.constant 1 : index
    %c4_47 = arith.constant 4 : index
    %c0_48 = arith.constant 0 : index
    %88 = vector.load %arg4[%c0_45, %c1_46, %c4_47, %c0_48] : memref<1x2x8x256xf32, #tpu.memory_space<vmem>>, vector<1x1x4x256xf32>
    %89 = vector.shape_cast %88 : vector<1x1x4x256xf32> to vector<4x256xf32>
    %90 = vector.shape_cast %87 : vector<4x256xf32> to vector<1x1x4x256xf32>
    tpu.vector_store %arg4[%c0_45, %c1_46, %c4_47, %c0_48], %90 {strides = array<i32>} : memref<1x2x8x256xf32, #tpu.memory_space<vmem>>, vector<1x1x4x256xf32>,
    return
  }
  func.func @transform_0(%arg0: i32, %arg1: i32) -> (i32, i32) {
    %c0_i32 = arith.constant 0 : i32
    %c0_i32_0 = arith.constant 0 : i32
    %c0_i32_1 = arith.constant 0 : i32
    return %c0_i32, %c0_i32_0 : i32, i32
  }
  func.func @transform_1(%arg0: i32, %arg1: i32) -> (i32, i32, i32, i32) {
    %c0_i32 = arith.constant 0 : i32
    %c0_i32_0 = arith.constant 0 : i32
    %c0_i32_1 = arith.constant 0 : i32
    return %arg0, %c0_i32, %c0_i32_0, %arg1 : i32, i32, i32, i32
  }
  func.func @transform_2(%arg0: i32, %arg1: i32) -> (i32, i32, i32, i32) {
    %c0_i32 = arith.constant 0 : i32
    %c0_i32_0 = arith.constant 0 : i32
    %c0_i32_1 = arith.constant 0 : i32
    return %arg0, %c0_i32, %c0_i32_0, %arg1 : i32, i32, i32, i32
  }
}

</mosaic_0001>

<llo_original>
// kernel: a_call__.1
$region0: #{a_call__.1}
  #allocation0 [shape = 'u32[]', space=smem, size = 0x4, offset = 0x4, fixed_abs, tag = 'smem constant byte address 0x4 - core index']
  #allocation1 [shape = 'u32[72,128]{1,0:T(1,128)}', space=vmem, size = 0x9000, scoped, tag = 'internal scratch']
  %s0 = inlined_call_operand.vmem [shape: f32[2,2], index: 0, kind: input, shape index: {}]
  %s1 = inlined_call_operand.vmem [shape: f32[2,2,8,256], index: 1, kind: input, shape index: {}]
  %s2 = inlined_call_operand.hbm [shape: f32[2,2,8,256], index: 2, kind: output, shape index: {}]
  %s3 = sld [smem:[#allocation0]]
  $region45: #{a_call__.1} parent=0
    _
  %s5 = ssub.s32 1, %s3
  %s6 = scalar_select 0, %s5, %s3
  $region1: #{a_call__.1} parent=0
    #allocation2 [shape = 'u8[1024]{0}', space=smem, size = 0x400, scoped, tag = 'input window, operand 0, single buffered']
    #allocation3 [shape = 's32[2]{0}', space=sflag, size = 0x8, scoped, tag = 'scoped memory for a_call__.1']
    #allocation4 [shape = 's32[2]{0}', space=sflag, size = 0x8, scoped, tag = 'scoped memory for a_call__.1']
    #allocation5 [shape = 'u8[32768]{0}', space=vmem, size = 0x8000, scoped, tag = 'output window, operand 0']
    %7 = vsyncpa [#allocation4], 0
    %8 = vsyncpa [#allocation3], 0
    %s9 = scalar_lea.sflag [#allocation3], 1
    %10 = vsyncpa %s9, 0
    loop: start=0, step=1, limit=4
    $region2: #{a_call__.1} parent=1 // loop_pre_header
      _
    $region3: #{a_call__.1} parent=1 // loop_header
      %s12 = sphi 0, %s16
      %p13 = scmp.ge.s32.totalorder %s12, 4
      %s19 = sphi 0, %s31
      %s20 = sphi 0, %s27
      %s21 = sphi 0, %s19
      %s22 = sphi 0, %s20
      %s23 = sphi 0, %s21
      %s24 = sphi 0, %s22
      %s32 = sphi 0, %s32
      %s34 = sphi 0, %s32
      %s35 = sphi 0, %s34
      %s49 = sphi 0, %s35
      %s57 = sphi 0, %s59
      %s60 = sphi 0, %s57
      %s61 = sphi 0, %s60
      %s77 = sphi 0, %s61
      %s85 = sphi 0, %s87
      %s88 = sphi 0, %s85
      %s89 = sphi 0, %s88
      %s105 = sphi 0, %s89
    $region4: #{a_call__.1} parent=1 // loop_header_branch
      %15 = sbr.rel (%p13) target = $region8
    $region5: #{a_call__.1} parent=1 // loop_body
      %s17 = ssub.s32 %s12, 1
      %s18 = ssub.s32 %s12, 2
      %s25 = sadd.s32 1, %s20
      %p26 = scmp.ge.s32.totalorder %s25, 1
      %s27 = scalar_select %p26, 0, %s25
      %s28 = sadd.s32 1, %s19
      %s29 = scalar_select %p26, %s28, %s19
      %p30 = scmp.ge.s32.totalorder %s29, 2
      %s31 = scalar_select %p30, 0, %s29
      %s33 = sadd.s32 %s32, 1
      %p36 = scmp.eq.s32.totalorder %s12, 1
      %p37 = scmp.ne.s32.totalorder %s32, %s34
      %p38 = scmp.eq.s32.totalorder %s12, 0
      %p39 = por %p37, %p38
      %p40 = scmp.ne.s32.totalorder %s32, %s34
      %p41 = scmp.eq.s32.totalorder %s17, 1
      %p42 = por %p40, %p41
      %p43 = scmp.ne.s32.totalorder %s34, %s35
      %p44 = scmp.eq.s32.totalorder %s17, 0
      %p45 = por %p43, %p44
      %p46 = scmp.ne.s32.totalorder %s34, %s35
      %p47 = scmp.eq.s32.totalorder %s18, 1
      %p48 = por %p46, %p47
      %p50 = scmp.ne.s32.totalorder %s35, %s49
      %p51 = scmp.eq.s32.totalorder %s18, 0
      %p52 = por %p50, %p51
      %s53 = ssub.s32 %s19, %s31
      %s54 = ssub.s32 %s20, %s27
      %s55 = sor.u32 %s53, %s54
      %p56 = scmp.eq.s32.totalorder %s55, 0
      %s58 = sadd.s32 %s57, 1
      %s59 = scalar_select %p56, %s57, %s58
      %p62 = pneg %p56
      %p63 = scmp.eq.s32.totalorder %s12, 1
      %p64 = por %p62, %p63
      %p65 = scmp.ne.s32.totalorder %s57, %s60
      %p66 = scmp.eq.s32.totalorder %s12, 0
      %p67 = por %p65, %p66
      %p68 = scmp.ne.s32.totalorder %s57, %s60
      %p69 = scmp.eq.s32.totalorder %s17, 1
      %p70 = por %p68, %p69
      %p71 = scmp.ne.s32.totalorder %s60, %s61
      %p72 = scmp.eq.s32.totalorder %s17, 0
      %p73 = por %p71, %p72
      %p74 = scmp.ne.s32.totalorder %s60, %s61
      %p75 = scmp.eq.s32.totalorder %s18, 1
      %p76 = por %p74, %p75
      %p78 = scmp.ne.s32.totalorder %s61, %s77
      %p79 = scmp.eq.s32.totalorder %s18, 0
      %p80 = por %p78, %p79
      %s81 = ssub.s32 %s19, %s31
      %s82 = ssub.s32 %s20, %s27
      %s83 = sor.u32 %s81, %s82
      %p84 = scmp.eq.s32.totalorder %s83, 0
      %s86 = sadd.s32 %s85, 1
      %s87 = scalar_select %p84, %s85, %s86
      %p90 = pneg %p84
      %p91 = scmp.eq.s32.totalorder %s12, 1
      %p92 = por %p90, %p91
      %p93 = scmp.ne.s32.totalorder %s85, %s88
      %p94 = scmp.eq.s32.totalorder %s12, 0
      %p95 = por %p93, %p94
      %p96 = scmp.ne.s32.totalorder %s85, %s88
      %p97 = scmp.eq.s32.totalorder %s17, 1
      %p98 = por %p96, %p97
      %p99 = scmp.ne.s32.totalorder %s88, %s89
      %p100 = scmp.eq.s32.totalorder %s17, 0
      %p101 = por %p99, %p100
      %p102 = scmp.ne.s32.totalorder %s88, %s89
      %p103 = scmp.eq.s32.totalorder %s18, 1
      %p104 = por %p102, %p103
      %p106 = scmp.ne.s32.totalorder %s89, %s105
      %p107 = scmp.eq.s32.totalorder %s18, 0
      %p108 = por %p106, %p107
      %p109 = scmp.le.s32.totalorder 1, %s12
      %p110 = scmp.lt.s32.totalorder %s12, 3
      %p111 = pnand %p109, %p110
      %p112 = pneg %p111
      // Predicated region
      $region9: #{a_call__.1} parent=5 // pred_check
        _
      $region10: #{a_call__.1} parent=5 // pred_check_branch
        %114 = sbr.rel (%p111) target = $region12
      $region11: #{a_call__.1} parent=5 // pred_region
        %s115 = ssub.s32 %s12, 1
        // Predicated region
        $region13: #{a_call__.1} parent=11 // pred_check
          %p116 = pneg %p45
        $region14: #{a_call__.1} parent=11 // pred_check_branch
          %118 = sbr.rel (%p116) target = $region16
        $region15: #{a_call__.1} parent=11 // pred_region
          %120 = vsyncadd [#allocation4], 0
          %s122 = sshll.u32 %s0, 4
          %s123 = int_to_ptr.vmem [resolvable:$true] %s122
          %125 = dma.vmem_to_smem %s123, 32, [#allocation2], [#allocation4]
        $region16: #{a_call__.1} parent=11 // pred_fallthru
          _
      $region12: #{a_call__.1} parent=5 // pred_fallthru
        _
      %p126 = scmp.lt.s32.totalorder %s12, 2
      // Predicated region
      $region17: #{a_call__.1} parent=5 // pred_check
        %p127 = pneg %p126
      $region18: #{a_call__.1} parent=5 // pred_check_branch
        %129 = sbr.rel (%p127) target = $region20
      $region19: #{a_call__.1} parent=5 // pred_region
        // Predicated region
        $region21: #{a_call__.1} parent=19 // pred_check
          %p130 = pneg %p67
        $region22: #{a_call__.1} parent=19 // pred_check_branch
          %132 = sbr.rel (%p130) target = $region24
        $region23: #{a_call__.1} parent=19 // pred_region
          %s133 = smul.u32 2, %s20
          %p134 = scmp.lt.s32.totalorder %s19, 1
          %s135 = scalar_select %p134, %s19, 1
          %p136 = scmp.lt.s32.totalorder %s133, 1
          %s137 = scalar_select %p136, %s133, 1
          %s138 = smul.addr %s135, 4
          %s139 = sadd.s32 %s137, %s138
          %s140 = smul.addr %s139, 8
          %s141 = scalar_lea.vmem %s1, %s140
          %s142 = smul.u32 2, %s20
        $region24: #{a_call__.1} parent=19 // pred_fallthru
          _
      $region20: #{a_call__.1} parent=5 // pred_fallthru
        _
      %p143 = scmp.le.s32.totalorder 1, %s12
      %p144 = scmp.lt.s32.totalorder %s12, 3
      %p145 = pnand %p143, %p144
      %p146 = pneg %p145
      // Predicated region
      $region25: #{a_call__.1} parent=5 // pred_check
        _
      $region26: #{a_call__.1} parent=5 // pred_check_branch
        %148 = sbr.rel (%p145) target = $region28
      $region27: #{a_call__.1} parent=5 // pred_region
        %s149 = ssub.s32 %s12, 1
        // Predicated region
        $region29: #{a_call__.1} parent=27 // pred_check
          %p150 = pneg %p45
        $region30: #{a_call__.1} parent=27 // pred_check_branch
          %152 = sbr.rel (%p150) target = $region32
        $region31: #{a_call__.1} parent=27 // pred_region
          %154 = dma.done [#allocation4], 32
        $region32: #{a_call__.1} parent=27 // pred_fallthru
          _
        %155 = sfence
        %p156 = pneg %p45
        %p157 = pneg %p42
        %s158 = smul.u32 2, %s22
        %p159 = scmp.lt.s32.totalorder %s21, 1
        %s160 = scalar_select %p159, %s21, 1
        %p161 = scmp.lt.s32.totalorder %s158, 1
        %s162 = scalar_select %p161, %s158, 1
        %s163 = smul.addr %s160, 4
        %s164 = sadd.s32 %s162, %s163
        %s165 = smul.addr %s164, 8
        %s166 = scalar_lea.vmem %s1, %s165
        %p167 = pneg %p73
        %p168 = pneg %p70
        %p169 = pneg %p101
        %p170 = pneg %p98
        %s171 = sand.u32 %s88, 1
        %s172 = scalar_lea.sflag [#allocation3], %s171
        %s173 = sand.u32 %s88, 1
        %s174 = smul.addr %s173, 32
        %s175 = scalar_lea.vmem [#allocation5], %s174
        %s176 = smul.u32 2, %s22
        %p177 = scmp.lt.s32.totalorder %s21, 1
        %s178 = scalar_select %p177, %s21, 1
        %p179 = scmp.lt.s32.totalorder %s176, 1
        %s180 = scalar_select %p179, %s176, 1
        %s181 = smul.addr %s178, 4
        %s182 = sadd.s32 %s180, %s181
        %s183 = smul.addr %s182, 8
        %s184 = scalar_lea.vmem %s1, %s183
        %s185 = smul.u32 2, %s22
        %s186 = smul.u32 2, %s22
        %v187 = vlaneseq
        %v188 = vand.u32 %v187, 127
        %v189 = vadd.s32 %v188, 128
        %s190 = smul.u32 %s22, 256
        %v191 = vstv %s190
        %v192 = vadd.s32 %v188, %v191
        %v193 = vadd.s32 %v189, %v191
        %v194 = vcvt.s32.f32 %v192
        %v195 = vcvt.s32.f32 %v193
        %v196 = vlaneseq
        %v197 = vshrl.u32 %v196, 7
        %v198 = vadd.f32 %v194, 0.5
        %v199 = vadd.f32 %v195, 0.5
        %v200 = vmul.f32 %v198, 0.0625
        %v201 = vmul.f32 %v199, 0.0625
        %v202 = vfloor.f32 %v200
        %v203 = vfloor.f32 %v201
        %vm204 = vcmp.eq.s32.totalorder %v197, 0
        %v205 = vmul.f32 %v202, 16.0
        %v206 = vmul.f32 %v203, 16.0
        %v207 = vsub.f32 %v194, %v205
        %v208 = vsub.f32 %v195, %v206
        %v209 = vsel %vm204, %v207, %v202
        %v210 = vsel %vm204, %v208, %v203
        %v211 = vld [vmem:[%s184] sm:$0xff]
        %v212 = vld [vmem:[%s184 + $0x8] sm:$0xff]
        %s213 = sld [smem:[#allocation2]]
        %s214 = sld [smem:[#allocation2 + $0x1]]
        %v215 = vxor.u32 %v211, 2147483648
        %v216 = vxor.u32 %v212, 2147483648
        %v217 = vmul.f32 %v215, 1.442695
        %v218 = vpow.pop %v217
        %v219 = vmul.f32 %v216, 1.442695
        %v220 = vpow.pop %v219
        %v221 = vadd.f32 %v218, 1.0
        %v222 = vadd.f32 %v220, 1.0
        %v223 = vrcp.pop %v221
        %v224 = vmul.f32 %v221, %v223
        %v225 = vsub.f32 1.0, %v224
        %v226 = vmul.f32 %v223, %v225
        %v227 = vadd.f32 %v223, %v226
        %vm228 = vweird.f32 %v221
        %vm229 = vweird.f32 %v223
        %vm230 = vmor %vm228, %vm229
        %v231 = vsel %vm230, %v223, %v227
        %v232 = vand.u32 2147483647, %v221
        %vm233 = vcmp.eq.f32.partialorder %v232, 8.507059e+37
        %v234 = vand.u32 %v221, 2147483648
        %v235 = vor.u32 1.1754944e-38, %v234
        %v236 = vsel %vm233, %v235, %v231
        %v237 = vmul.f32 1.0, %v236
        %v238 = vrcp.pop %v222
        %v239 = vmul.f32 %v222, %v238
        %v240 = vsub.f32 1.0, %v239
        %v241 = vmul.f32 %v238, %v240
        %v242 = vadd.f32 %v238, %v241
        %vm243 = vweird.f32 %v222
        %vm244 = vweird.f32 %v238
        %vm245 = vmor %vm243, %vm244
        %v246 = vsel %vm245, %v238, %v242
        %v247 = vand.u32 2147483647, %v222
        %vm248 = vcmp.eq.f32.partialorder %v247, 8.507059e+37
        %v249 = vand.u32 %v222, 2147483648
        %v250 = vor.u32 1.1754944e-38, %v249
        %v251 = vsel %vm248, %v250, %v246
        %v252 = vmul.f32 1.0, %v251
        %v253 = vadd.f32 %v237, %v209
        %v254 = vadd.f32 %v252, %v210
        %255 = vst [vmem:[%s175] sm:$0x3] %v253
        %256 = vst [vmem:[%s175 + $0x8] sm:$0x3] %v254
        %v257 = vmul.f32 %v211, 1.442695
        %v258 = vpow.pop %v257
        %v259 = vmul.f32 %v212, 1.442695
        %v260 = vpow.pop %v259
        %v261 = vstv %s213
        %v262 = vmul.f32 %v258, %v261
        %v263 = vmul.f32 %v260, %v261
        %266 = vst [vmem:[#allocation1] sm:$0xff] %v262
        %267 = vst [vmem:[#allocation1 + $0x9] sm:$0xff] %v263
        %s268 = scalar_lea.vmem [#allocation1], 2
        %v269 = vld [vmem:[%s268] ss:$9 sm:$0xff]
        %v271 = vlaneseq
        %vm272 = vcmp.ge.s32.totalorder %v271, 0
        %vm273 = vcmp.lt.s32.totalorder %v271, 256
        %vm274 = vmand %vm272, %vm273
        %s275 = scalar_lea.vmem %s175, 2 [#allocation5]
        %276 = vst.msk [vmem:[%s275] ss:$8 sm:$0x3] %vm274, %v269
        %277 = vst.msk [vmem:[%s275] ss:$8 sm:$0x0] %vm274, %v269
        %v278 = vstv %s214
        %v279 = vmul.f32 %v258, %v278
        %v280 = vmul.f32 %v260, %v278
        %283 = vst [vmem:[#allocation1] sm:$0xff] %v279
        %284 = vst [vmem:[#allocation1 + $0x9] sm:$0xff] %v280
        %s285 = scalar_lea.vmem [#allocation1], 3
        %v286 = vld [vmem:[%s285] ss:$9 sm:$0xff]
        %s288 = scalar_lea.vmem %s175, 3 [#allocation5]
        %289 = vst.msk [vmem:[%s288] ss:$8 sm:$0x3] %vm274, %v286
        %290 = vst.msk [vmem:[%s288] ss:$8 sm:$0x0] %vm274, %v286
        %291 = vst [vmem:[%s175] sm:$0xf0] %v237
        %292 = vst [vmem:[%s175 + $0x8] sm:$0xf0] %v252
        %s293 = scalar_lea.vmem %s184, 16
        %v294 = vld [vmem:[%s293] sm:$0xff]
        %v295 = vld [vmem:[%s293 + $0x8] sm:$0xff]
        %s296 = sld [smem:[#allocation2 + $0x80]]
        %s297 = sld [smem:[#allocation2 + $0x81]]
        %v298 = vxor.u32 %v294, 2147483648
        %v299 = vxor.u32 %v295, 2147483648
        %v300 = vmul.f32 %v298, 1.442695
        %v301 = vpow.pop %v300
        %v302 = vmul.f32 %v299, 1.442695
        %v303 = vpow.pop %v302
        %v304 = vadd.f32 %v301, 1.0
        %v305 = vadd.f32 %v303, 1.0
        %v306 = vrcp.pop %v304
        %v307 = vmul.f32 %v304, %v306
        %v308 = vsub.f32 1.0, %v307
        %v309 = vmul.f32 %v306, %v308
        %v310 = vadd.f32 %v306, %v309
        %vm311 = vweird.f32 %v304
        %vm312 = vweird.f32 %v306
        %vm313 = vmor %vm311, %vm312
        %v314 = vsel %vm313, %v306, %v310
        %v315 = vand.u32 2147483647, %v304
        %vm316 = vcmp.eq.f32.partialorder %v315, 8.507059e+37
        %v317 = vand.u32 %v304, 2147483648
        %v318 = vor.u32 1.1754944e-38, %v317
        %v319 = vsel %vm316, %v318, %v314
        %v320 = vmul.f32 1.0, %v319
        %v321 = vrcp.pop %v305
        %v322 = vmul.f32 %v305, %v321
        %v323 = vsub.f32 1.0, %v322
        %v324 = vmul.f32 %v321, %v323
        %v325 = vadd.f32 %v321, %v324
        %vm326 = vweird.f32 %v305
        %vm327 = vweird.f32 %v321
        %vm328 = vmor %vm326, %vm327
        %v329 = vsel %vm328, %v321, %v325
        %v330 = vand.u32 2147483647, %v305
        %vm331 = vcmp.eq.f32.partialorder %v330, 8.507059e+37
        %v332 = vand.u32 %v305, 2147483648
        %v333 = vor.u32 1.1754944e-38, %v332
        %v334 = vsel %vm331, %v333, %v329
        %v335 = vmul.f32 1.0, %v334
        %v336 = vadd.f32 %v320, %v209
        %v337 = vadd.f32 %v335, %v210
        %s338 = scalar_lea.vmem %s175, 16 [#allocation5]
        %339 = vst [vmem:[%s338] sm:$0x3] %v336
        %340 = vst [vmem:[%s338 + $0x8] sm:$0x3] %v337
        %v341 = vmul.f32 %v294, 1.442695
        %v342 = vpow.pop %v341
        %v343 = vmul.f32 %v295, 1.442695
        %v344 = vpow.pop %v343
        %v345 = vstv %s296
        %v346 = vmul.f32 %v342, %v345
        %v347 = vmul.f32 %v344, %v345
        %350 = vst [vmem:[#allocation1] sm:$0xff] %v346
        %351 = vst [vmem:[#allocation1 + $0x9] sm:$0xff] %v347
        %s352 = scalar_lea.vmem [#allocation1], 2
        %v353 = vld [vmem:[%s352] ss:$9 sm:$0xff]
        %s355 = scalar_lea.vmem %s338, 2 [#allocation5]
        %356 = vst.msk [vmem:[%s355] ss:$8 sm:$0x3] %vm274, %v353
        %357 = vst.msk [vmem:[%s355] ss:$8 sm:$0x0] %vm274, %v353
        %v358 = vstv %s297
        %v359 = vmul.f32 %v342, %v358
        %v360 = vmul.f32 %v344, %v358
        %363 = vst [vmem:[#allocation1] sm:$0xff] %v359
        %364 = vst [vmem:[#allocation1 + $0x9] sm:$0xff] %v360
        %s365 = scalar_lea.vmem [#allocation1], 3
        %v366 = vld [vmem:[%s365] ss:$9 sm:$0xff]
        %s368 = scalar_lea.vmem %s338, 3 [#allocation5]
        %369 = vst.msk [vmem:[%s368] ss:$8 sm:$0x3] %vm274, %v366
        %370 = vst.msk [vmem:[%s368] ss:$8 sm:$0x0] %vm274, %v366
        %371 = vst [vmem:[%s338] sm:$0xf0] %v320
        %372 = vst [vmem:[%s338 + $0x8] sm:$0xf0] %v335
        %s373 = sand.u32 %s88, 1
        %s374 = scalar_lea.sflag [#allocation3], %s373
        %s375 = sand.u32 %s88, 1
        %s376 = smul.addr %s375, 32
        %s377 = scalar_lea.vmem [#allocation5], %s376
        // Predicated region
        $region33: #{a_call__.1} parent=27 // pred_check
          %p378 = pneg %p98
        $region34: #{a_call__.1} parent=27 // pred_check_branch
          %380 = sbr.rel (%p378) target = $region36
        $region35: #{a_call__.1} parent=27 // pred_region
          %s381 = smul.u32 2, %s22
          %383 = vsyncadd %s374, 0
          %s384 = smul.addr %s21, 4
          %s385 = sadd.s32 %s381, %s384
          %s386 = smul.addr %s385, 8
          %s387 = scalar_lea.hbm %s2, %s386
          %s388 = sshll.u32 %s377, 4
          %s389 = int_to_ptr.vmem [resolvable:$true] %s388
          %s390 = sshll.u32 %s387, 4
          %s391 = int_to_ptr.hbm [resolvable:$true] %s390
          %396 = dma.vmem_to_hbm [thread:$0]  %s389, 512, %s391, %s374, 256, 256, 16
        $region36: #{a_call__.1} parent=27 // pred_fallthru
          _
      $region28: #{a_call__.1} parent=5 // pred_fallthru
        _
      %p397 = scmp.le.s32.totalorder 2, %s12
      // Predicated region
      $region37: #{a_call__.1} parent=5 // pred_check
        %p398 = pneg %p397
      $region38: #{a_call__.1} parent=5 // pred_check_branch
        %400 = sbr.rel (%p398) target = $region40
      $region39: #{a_call__.1} parent=5 // pred_region
        %s401 = ssub.s32 %s12, 2
        // Predicated region
        $region41: #{a_call__.1} parent=39 // pred_check
          %p402 = pneg %p104
        $region42: #{a_call__.1} parent=39 // pred_check_branch
          %404 = sbr.rel (%p402) target = $region44
        $region43: #{a_call__.1} parent=39 // pred_region
          %s405 = sand.u32 %s89, 1
          %s406 = scalar_lea.sflag [#allocation3], %s405
          %s407 = sand.u32 %s89, 1
          %s408 = smul.addr %s407, 32
          %s409 = scalar_lea.vmem [#allocation5], %s408
          %411 = dma.done %s406, 512
        $region44: #{a_call__.1} parent=39 // pred_fallthru
          _
      $region40: #{a_call__.1} parent=5 // pred_fallthru
        _
    $region6: #{a_call__.1} parent=1 // loop_footer
      %s16 = sadd.s32 1, %s12
    $region7: #{a_call__.1} parent=1 // loop_footer_branch
      %11 = sbr.rel target = $region3
    $region8: #{a_call__.1} parent=1 // loop_exit
      _
    %412 = vsyncpa [#allocation3], 1
    %s413 = scalar_lea.sflag [#allocation3], 1
    %414 = vsyncpa %s413, 1
    %415 = vsyncpa [#allocation4], 1
    %s416 = scalar_lea.sflag [#allocation4], 1
    %417 = vsyncpa %s416, 1

</llo_original>
